<compile_context>
chip_gen: v7x
topology: tpu7x:2x2x1
jax: 0.10.0
libtpu: 0.0.40
codegen_flags: <defaults>
</compile_context>

<pallas_src>
import math

import jax
import jax.numpy as jnp
from jax.experimental import pallas as pl
from jax.experimental.pallas import tpu as pltpu


def _norm_kernel(x_ref, mean_ref, o_ref):
    # x_ref: (TILE_M, W), mean_ref: (1, W) -> broadcasts over rows.
    o_ref[...] = (x_ref[...] - mean_ref[...]).astype(o_ref.dtype)


def _denorm_kernel(x_ref, mean_ref, o_ref):
    o_ref[...] = (x_ref[...] + mean_ref[...]).astype(o_ref.dtype)


def detrender_forward(x: jax.Array, mean: jax.Array, mode: str,
                      *, tile_bytes: int = 1 << 20) -> jax.Array:
    """Pallas equivalent of Detrender.forward(x, mode).

    x:    (B, T, C)
    mean: (1, 1, C)   (non-trainable running-mean parameter)
    """
    if mode == "norm":
        kernel = _norm_kernel
    elif mode == "denorm":
        kernel = _denorm_kernel
    else:
        raise NotImplementedError(mode)

    B, T, C = x.shape
    assert mean.shape == (1, 1, C)

    rows = B * T

    # --- lane-dense repacking -------------------------------------------------
    # Group g consecutive (batch*time) rows so the flattened last dim g*C is a
    # multiple of 128 lanes (full vst, no masked partial stores).
    g = 128 // math.gcd(C, 128)
    if rows % g == 0:
        M, W = rows // g, g * C
        x2 = x.reshape(M, W)
        mean_row = jnp.tile(mean.reshape(1, C), (1, g))
    else:
        # Fallback: lane-sparse last dim; block last dim == full array dim so
        # the (8,128) rule is still satisfied.
        M, W = rows, C
        x2 = x.reshape(M, W)
        mean_row = mean.reshape(1, C)

    # --- row-tile selection (~tile_bytes per block, multiple of 8) ------------
    itemsize = jnp.dtype(x.dtype).itemsize
    tile_m = max(1, tile_bytes // (W * itemsize))
    tile_m = max(8, (tile_m // 8) * 8)
    if tile_m >= M:
        tile_m = M  # single block: first dim equals full array dim.
    grid_m = pl.cdiv(M, tile_m)

    nbytes = x2.size * itemsize
    cost = pl.CostEstimate(
        flops=x2.size,
        transcendentals=0,
        bytes_accessed=2 * nbytes
        + mean_row.size * jnp.dtype(mean_row.dtype).itemsize,
    )

    out = pl.pallas_call(
        kernel,
        out_shape=jax.ShapeDtypeStruct((M, W), x.dtype),
        grid_spec=pltpu.PrefetchScalarGridSpec(
            num_scalar_prefetch=0,
            grid=(grid_m,),
            in_specs=[
                pl.BlockSpec((tile_m, W), lambda i: (i, 0)),
                pl.BlockSpec((1, W), lambda i: (0, 0)),  # resident mean block
            ],
            out_specs=pl.BlockSpec((tile_m, W), lambda i: (i, 0)),
        ),
        compiler_params=pltpu.CompilerParams(
            dimension_semantics=("parallel",),
        ),
        cost_estimate=cost,
    )(x2, mean_row)

    return out.reshape(B, T, C)


if __name__ == "__main__":
    key = jax.random.PRNGKey(0)
    kx, kx2, kx3 = jax.random.split(key, 3)

    # ---- main case: (B, T, C) = (2, 8, 32); lane-dense path (g*C = 128) -----
    B, T, C = 2, 8, 32
    x = jax.random.normal(kx, (B, T, C), dtype=jnp.float32)
    mean_init = jnp.zeros((1, 1, C), dtype=jnp.float32)            # as in __init__
    mean_nz = 0.1 * jnp.arange(C, dtype=jnp.float32).reshape(1, 1, C)

    y0 = detrender_forward(x, mean_init, "norm")
    y_norm = detrender_forward(x, mean_nz, "norm")
    y_denorm = detrender_forward(y_norm, mean_nz, "denorm")
    jax.block_until_ready((y0, y_norm, y_denorm))

    assert jnp.allclose(y0, x, atol=1e-6)
    assert jnp.allclose(y_norm, x - mean_nz, atol=1e-6)
    assert jnp.allclose(y_denorm, x, atol=1e-5)

    # ---- multi-step grid (forces tiling + remainder handling) ---------------
    B2, T2, C2 = 4, 64, 32
    xb = jax.random.normal(kx2, (B2, T2, C2), dtype=jnp.float32)
    mb = 0.01 * jnp.arange(C2, dtype=jnp.float32).reshape(1, 1, C2)
    yb = detrender_forward(xb, mb, "norm", tile_bytes=4096)  # tiny tiles -> grid > 1
    jax.block_until_ready(yb)
    assert jnp.allclose(yb, xb - mb, atol=1e-6)

    # ---- fallback (lane-sparse) path: C does not pack to 128 cleanly --------
    B3, T3, C3 = 2, 6, 10
    xc = jax.random.normal(kx3, (B3, T3, C3), dtype=jnp.float32)
    mc = 0.5 * jnp.ones((1, 1, C3), dtype=jnp.float32)
    yc = detrender_forward(xc, mc, "denorm")
    jax.block_until_ready(yc)
    assert jnp.allclose(yc, xc + mc, atol=1e-6)

    # ---- mixed dtype robustness: bf16 x, f32 mean ----------------------------
    xd = x.astype(jnp.bfloat16)
    yd = detrender_forward(xd, mean_nz, "norm")
    jax.block_until_ready(yd)
    assert yd.dtype == jnp.bfloat16
    assert jnp.allclose(yd.astype(jnp.float32),
                        (xd.astype(jnp.float32) - mean_nz), atol=3e-2)

    print("KERNEL_OK")
</pallas_src>

<mosaic_0001>
module attributes {stable_mosaic.version = 11 : i64} {
  func.func @_norm_kernel(%arg0: i32, %arg1: memref<4x128xf32, #tpu.memory_space<vmem>>, %arg2: memref<1x128xf32, #tpu.memory_space<vmem>>, %arg3: memref<4x128xf32, #tpu.memory_space<vmem>>) attributes {dimension_semantics = [#tpu.dimension_semantics<parallel>], iteration_bounds = array<i64: 1>, scalar_prefetch = 0 : i64, scratch_operands = 0 : i64, tpu.core_type = #tpu.core_type<tc>, window_params = [{transform_indices = @transform_0, window_bounds = array<i64: 4, 128>}, {pipeline_mode = #tpu.pipeline_mode<synchronous>, transform_indices = @transform_1, window_bounds = array<i64: 1, 128>}, {transform_indices = @transform_2, window_bounds = array<i64: 4, 128>}]} {
    %c0 = arith.constant 0 : index
    %c0_0 = arith.constant 0 : index
    %0 = vector.load %arg1[%c0, %c0_0] : memref<4x128xf32, #tpu.memory_space<vmem>>, vector<4x128xf32>
    %c0_1 = arith.constant 0 : index
    %c0_2 = arith.constant 0 : index
    %1 = vector.load %arg2[%c0_1, %c0_2] : memref<1x128xf32, #tpu.memory_space<vmem>>, vector<1x128xf32>
    %2 = vector.broadcast %1 : vector<1x128xf32> to vector<4x128xf32>
    %3 = arith.subf %0, %2 : vector<4x128xf32>
    %c0_3 = arith.constant 0 : index
    %c0_4 = arith.constant 0 : index
    %4 = vector.load %arg3[%c0_3, %c0_4] : memref<4x128xf32, #tpu.memory_space<vmem>>, vector<4x128xf32>
    tpu.vector_store %arg3[%c0_3, %c0_4], %3 {strides = array<i32>} : memref<4x128xf32, #tpu.memory_space<vmem>>, vector<4x128xf32>,
    return
  }
  func.func @transform_0(%arg0: i32) -> (i32, i32) {
    %c0_i32 = arith.constant 0 : i32
    %c0_i32_0 = arith.constant 0 : i32
    return %arg0, %c0_i32 : i32, i32
  }
  func.func @transform_1(%arg0: i32) -> (i32, i32) {
    %c0_i32 = arith.constant 0 : i32
    %c0_i32_0 = arith.constant 0 : i32
    %c0_i32_1 = arith.constant 0 : i32
    return %c0_i32, %c0_i32_0 : i32, i32
  }
  func.func @transform_2(%arg0: i32) -> (i32, i32) {
    %c0_i32 = arith.constant 0 : i32
    %c0_i32_0 = arith.constant 0 : i32
    return %arg0, %c0_i32 : i32, i32
  }
}

</mosaic_0001>

<llo_original>
// kernel: tpu_custom_call.1
$region0: #{tpu_custom_call.1}
  #allocation0 [shape = 'u32[]', space=smem, size = 0x4, offset = 0x4, fixed_abs, tag = 'smem constant byte address 0x4 - core index']
  #allocation1 [shape = 'u32[144,128]{1,0:T(1,128)}', space=vmem, size = 0x12000, scoped, tag = 'internal scratch']
  %s0 = inlined_call_operand.hbm [shape: f32[4,128], index: 0, kind: input, shape index: {}]
  %s1 = inlined_call_operand.vmem [shape: f32[1,128], index: 1, kind: input, shape index: {}]
  %s2 = inlined_call_operand.hbm [shape: f32[4,128], index: 2, kind: output, shape index: {}]
  %s3 = sld [smem:[#allocation0]]
  $region22: #{tpu_custom_call.1} parent=0
    _
  %s5 = ssub.s32 1, %s3
  %s6 = scalar_select 0, %s5, %s3
  $region1: #{tpu_custom_call.1} parent=0
    #allocation2 [shape = 'u8[2048]{0}', space=vmem, size = 0x800, scoped, tag = 'input window, operand 0, single buffered']
    #allocation3 [shape = 's32[1]{0}', space=sflag, size = 0x4, scoped, tag = 'scoped memory for tpu_custom_call.1']
    #allocation4 [shape = 's32[1]{0}', space=sflag, size = 0x4, scoped, tag = 'scoped memory for tpu_custom_call.1']
    #allocation5 [shape = 'u8[2048]{0}', space=vmem, size = 0x800, scoped, tag = 'output window, operand 0, single buffered']
    %7 = vsyncpa [#allocation3], 0
    %8 = vsyncpa [#allocation4], 0
    // Predicated region
    $region2: #{tpu_custom_call.1} parent=1 // pred_check
      _
    $region3: #{tpu_custom_call.1} parent=1 // pred_check_branch
      %10 = sbr.rel (0) target = $region5
    $region4: #{tpu_custom_call.1} parent=1 // pred_region
      %s12 = ssub.s32 64, 64
      %13 = vsyncadd [#allocation3], %s12
      %s15 = sshll.u32 [#allocation2], 4
      %s16 = int_to_ptr.vmem [resolvable:$true] %s15
      %18 = dma.hbm_to_vmem [thread:$0]  %s0, 64, %s16, [#allocation3]
    $region5: #{tpu_custom_call.1} parent=1 // pred_fallthru
      _
    // Predicated region
    $region6: #{tpu_custom_call.1} parent=1 // pred_check
      _
    $region7: #{tpu_custom_call.1} parent=1 // pred_check_branch
      %20 = sbr.rel (0) target = $region9
    $region8: #{tpu_custom_call.1} parent=1 // pred_region
      _
    $region9: #{tpu_custom_call.1} parent=1 // pred_fallthru
      _
    // Predicated region
    $region10: #{tpu_custom_call.1} parent=1 // pred_check
      _
    $region11: #{tpu_custom_call.1} parent=1 // pred_check_branch
      %22 = sbr.rel (0) target = $region13
    $region12: #{tpu_custom_call.1} parent=1 // pred_region
      %23 = dma.done [#allocation3], 64
    $region13: #{tpu_custom_call.1} parent=1 // pred_fallthru
      _
    %v24 = vld [vmem:[#allocation2] sm:$0xf]
    %v25 = vld [vmem:[%s1] sm:$0x1]
    %v27 = vlaneseq
    %v28 = vshrl.u32 %v27, 7
    %v29 = vsub.s32 0, %v28
    %v30 = vrot.slane %v25, %v29
    %v32 = vsub.f32 %v24, %v30
    %33 = vst [vmem:[#allocation5] sm:$0xf] %v32
    // Predicated region
    $region14: #{tpu_custom_call.1} parent=1 // pred_check
      _
    $region15: #{tpu_custom_call.1} parent=1 // pred_check_branch
      %35 = sbr.rel (0) target = $region17
    $region16: #{tpu_custom_call.1} parent=1 // pred_region
      %s37 = ssub.s32 64, 64
      %38 = vsyncadd [#allocation4], %s37
      %s40 = sshll.u32 [#allocation5], 4
      %s41 = int_to_ptr.vmem [resolvable:$true] %s40
      %43 = dma.vmem_to_hbm [thread:$0]  %s41, 64, %s2, [#allocation4]
    $region17: #{tpu_custom_call.1} parent=1 // pred_fallthru
      _
    // Predicated region
    $region18: #{tpu_custom_call.1} parent=1 // pred_check
      _
    $region19: #{tpu_custom_call.1} parent=1 // pred_check_branch
      %45 = sbr.rel (0) target = $region21
    $region20: #{tpu_custom_call.1} parent=1 // pred_region
      %46 = dma.done [#allocation4], 64
    $region21: #{tpu_custom_call.1} parent=1 // pred_fallthru
      _
    %47 = vsyncpa [#allocation3], 1
    %48 = vsyncpa [#allocation4], 1

</llo_original>
